<compile_context>
chip_gen: v7x
topology: tpu7x:2x2x1
jax: 0.10.0
libtpu: 0.0.40
codegen_flags: <defaults>
</compile_context>

<pallas_src>
import jax
import jax.numpy as jnp
from jax.experimental import pallas as pl
from jax.experimental.pallas import tpu as pltpu

EPS = 1e-06

# --- Clifford algebra Cl(3,0) structure (static) ------------------------------
D_SPACE = 3
N_BLADES = 2 ** D_SPACE                        # 8
SUBSPACES = (1, 3, 3, 1)                       # blades per grade
N_SUBSPACES = len(SUBSPACES)                   # 4
GRADE_SLICES = ((0, 1), (1, 4), (4, 7), (7, 8))
BLADE_GRADE = (0, 1, 1, 1, 2, 2, 2, 3)         # grade of each blade
BLADE_INDICES = ((), (0,), (1,), (2,), (0, 1), (0, 2), (1, 2), (0, 1, 2))

# --- Fixed chunking constants ---------------------------------------------------
FEAT_CHUNK = 16                                # features per selector chunk
LANE_CHUNK = FEAT_CHUNK * N_BLADES             # 128 lanes (one vreg row group)
COMPACT_CHUNK = FEAT_CHUNK * N_SUBSPACES       # 64 lanes of grade norms


# --- Pallas kernel -------------------------------------------------------------
def _norm_kernel(x_ref, sa_ref, sw_ref, se_ref, o_ref):
    sw = sw_ref[...]                                    # (128, 64) weighted blade->grade
    se = se_ref[...]                                    # (64, 128) grade->blade expansion
    n_chunks = x_ref.shape[1] // LANE_CHUNK             # static
    for c in range(n_chunks):                           # small static unroll
        lo = c * LANE_CHUNK
        co = c * COMPACT_CHUNK
        x = x_ref[:, lo:lo + LANE_CHUNK].astype(jnp.float32)            # (TB, 128)
        # grade quadratic forms: tiny fixed selector matmul on the MXU
        q = jnp.dot(x * x, sw, preferred_element_type=jnp.float32)      # (TB, 64)
        n = jnp.sqrt(jnp.abs(q))
        sa = sa_ref[0, :, co:co + COMPACT_CHUNK]                        # (1, 64)
        denom = sa * (n - 1.0) + (1.0 + EPS)                            # gated norm + EPS
        r = pl.reciprocal(denom, approx=True)                           # EUP slot
        r = r * (2.0 - denom * r)                                       # 1 Newton-Raphson step
        inv = jnp.dot(r, se, preferred_element_type=jnp.float32)        # (TB, 128) repeat_interleave
        o_ref[:, lo:lo + LANE_CHUNK] = (x * inv).astype(o_ref.dtype)


# --- Tiling helpers ------------------------------------------------------------
def _round_up(n, m):
    return ((n + m - 1) // m) * m


def _pick_lane_tile(lanes, cap=2048):
    # lanes is a multiple of 128; largest multiple-of-128 divisor of `lanes` <= cap.
    best = LANE_CHUNK
    d = LANE_CHUNK
    top = min(lanes, cap)
    while d <= top:
        if lanes % d == 0:
            best = d
        d += LANE_CHUNK
    return best


def _pick_batch_tile(b_pad, lane_tile, itemsize, target_bytes=4 << 20):
    # ~4 MiB tiles amortize per-grid-step overhead; TB is a multiple-of-8 divisor of b_pad.
    row_bytes = lane_tile * itemsize
    cap = max(8, (target_bytes // row_bytes) // 8 * 8)
    if b_pad <= cap:
        return b_pad
    best = 8
    d = 8
    while d <= cap:
        if b_pad % d == 0:
            best = d
        d += 8
    return best


# --- Wrapper -------------------------------------------------------------------
def normalization_forward(x, a, blade_w):
    B, F, D = x.shape
    assert D == N_BLADES and a.shape == (F, N_SUBSPACES)
    itemsize = x.dtype.itemsize

    # Pad so every tile is (8, 128)-aligned -> unmasked vld/vst everywhere.
    F_pad = _round_up(F, FEAT_CHUNK)
    B_pad = _round_up(B, 8)
    lanes = F_pad * N_BLADES

    TL = _pick_lane_tile(lanes)
    TB = _pick_batch_tile(B_pad, TL, itemsize)

    # v7x megacore: never leave the grid at (1, 1) when the problem is splittable.
    if TB == B_pad and TL == lanes:
        if lanes % (2 * LANE_CHUNK) == 0:
            TL = lanes // 2
        elif B_pad >= 16:
            B_pad = _round_up(B_pad, 16)
            TB = B_pad // 2

    TF = TL // N_BLADES
    n_ftiles = lanes // TL

    if B_pad != B or F_pad != F:
        x = jnp.pad(x, ((0, B_pad - B), (0, F_pad - F), (0, 0)))
        a = jnp.pad(a, ((0, F_pad - F), (0, 0)))

    # Lane-dense flat view (contiguous reshape, no data movement).
    x_flat = x.reshape(B_pad, lanes)

    # sigmoid(a) hoisted out of the kernel; (n_ftiles, 1, TF*4) so each feature-tile
    # block covers the full minor extent (always a legal lane width).
    s_a = jax.nn.sigmoid(a.astype(jnp.float32)).reshape(n_ftiles, 1, TF * N_SUBSPACES)

    # Fixed per-16-feature-chunk selectors; blade weights folded into the summing
    # selector. Only ~64 KiB total, so default double-buffering costs ~128 KiB VMEM.
    s8 = jnp.zeros((N_BLADES, N_SUBSPACES), jnp.float32)
    s8 = s8.at[jnp.arange(N_BLADES), jnp.asarray(BLADE_GRADE)].set(1.0)
    sw8 = s8 * blade_w.astype(jnp.float32)[:, None]
    eye = jnp.eye(FEAT_CHUNK, dtype=jnp.float32)
    S_w = jnp.kron(eye, sw8)           # (128, 64): weighted blade -> grade sums
    S_e = jnp.kron(eye, s8.T)          # (64, 128): grade -> blade expansion

    grid = (B_pad // TB, lanes // TL)
    out_flat = pl.pallas_call(
        _norm_kernel,
        out_shape=jax.ShapeDtypeStruct((B_pad, lanes), x.dtype),
        grid=grid,
        in_specs=[
            pl.BlockSpec((TB, TL), lambda bi, fi: (bi, fi)),                     # x tile
            pl.BlockSpec((1, 1, TF * N_SUBSPACES), lambda bi, fi: (fi, 0, 0)),   # sigmoid(a)
            pl.BlockSpec((LANE_CHUNK, COMPACT_CHUNK), lambda bi, fi: (0, 0)),    # S_w
            pl.BlockSpec((COMPACT_CHUNK, LANE_CHUNK), lambda bi, fi: (0, 0)),    # S_e
        ],
        out_specs=pl.BlockSpec((TB, TL), lambda bi, fi: (bi, fi)),
        compiler_params=pltpu.CompilerParams(
            dimension_semantics=("parallel", "parallel"),
            vmem_limit_bytes=32 * 1024 * 1024),
    )(x_flat, s_a, S_w, S_e)

    out = out_flat.reshape(B_pad, F_pad, N_BLADES)
    if B_pad != B or F_pad != F:
        out = out[:B, :F, :]
    return out


# --- Parameter / algebra setup (plain JAX glue) --------------------------------
def make_blade_weights(metric):
    # TODO(synk): torch.linalg.eig handles non-symmetric metrics; eigvalsh assumes symmetric.
    eigvals = jnp.linalg.eigvalsh(metric)                 # (d,)
    weights = []
    for idxs in BLADE_INDICES:
        if len(idxs) == 0:
            weights.append(jnp.array(1.0, dtype=eigvals.dtype))
        else:
            weights.append(jnp.prod(eigvals[jnp.array(idxs)]))
    return jnp.stack(weights)                             # (N_BLADES,)


def reference(x, a, blade_w):
    sq = x * x * blade_w[None, None, :]
    norms = jnp.concatenate(
        [jnp.sqrt(jnp.abs(sq[..., lo:hi].sum(-1, keepdims=True))) for lo, hi in GRADE_SLICES],
        axis=-1,
    )
    s_a = jax.nn.sigmoid(a)
    norms = s_a * (norms - 1.0) + 1.0
    norms = jnp.repeat(norms, jnp.array(SUBSPACES), axis=-1, total_repeat_length=N_BLADES)
    return x / (norms + EPS)


if __name__ == "__main__":
    key = jax.random.PRNGKey(0)
    # Small but non-trivial: exercises feature/batch padding (30->32, 60->64), the
    # in-kernel 128-lane chunk loop, and a multi-step parallel grid.
    B, F = 30, 60

    kx, ka = jax.random.split(key)
    x = jax.random.normal(kx, (B, F, N_BLADES), dtype=jnp.float32)
    # Learnable parameter (nn.Parameter(zeros + init)); random values stand in
    # for a trained state so the gating path is exercised non-trivially.
    a = 0.5 * jax.random.normal(ka, (F, N_SUBSPACES), dtype=jnp.float32)

    # Euclidean metric for Cl(3,0)
    metric = jnp.eye(D_SPACE, dtype=jnp.float32)
    blade_w = make_blade_weights(metric)

    out = jax.block_until_ready(normalization_forward(x, a, blade_w))
    ref = reference(x, a, blade_w)

    assert out.shape == x.shape and out.dtype == x.dtype
    assert jnp.allclose(out, ref, atol=1e-5, rtol=1e-5), "mismatch vs reference"

    print("KERNEL_OK")
</pallas_src>

<mosaic_0001>
module attributes {stable_mosaic.version = 11 : i64} {
  func.func @_norm_kernel(%arg0: i32, %arg1: i32, %arg2: memref<32x256xf32, #tpu.memory_space<vmem>>, %arg3: memref<1x1x128xf32, #tpu.memory_space<vmem>>, %arg4: memref<128x64xf32, #tpu.memory_space<vmem>>, %arg5: memref<64x128xf32, #tpu.memory_space<vmem>>, %arg6: memref<32x256xf32, #tpu.memory_space<vmem>>) attributes {dimension_semantics = [#tpu.dimension_semantics<parallel>, #tpu.dimension_semantics<parallel>], iteration_bounds = array<i64: 1, 2>, scalar_prefetch = 0 : i64, scratch_operands = 0 : i64, tpu.core_type = #tpu.core_type<tc>, window_params = [{transform_indices = @transform_0, window_bounds = array<i64: 32, 256>}, {transform_indices = @transform_1, window_bounds = array<i64: 1, 1, 128>}, {pipeline_mode = #tpu.pipeline_mode<synchronous>, transform_indices = @transform_2, window_bounds = array<i64: 128, 64>}, {pipeline_mode = #tpu.pipeline_mode<synchronous>, transform_indices = @transform_3, window_bounds = array<i64: 64, 128>}, {transform_indices = @transform_4, window_bounds = array<i64: 32, 256>}]} {
    %c0 = arith.constant 0 : index
    %c0_0 = arith.constant 0 : index
    %0 = vector.load %arg4[%c0, %c0_0] : memref<128x64xf32, #tpu.memory_space<vmem>>, vector<128x64xf32>
    %c0_1 = arith.constant 0 : index
    %c0_2 = arith.constant 0 : index
    %1 = vector.load %arg5[%c0_1, %c0_2] : memref<64x128xf32, #tpu.memory_space<vmem>>, vector<64x128xf32>
    %c0_3 = arith.constant 0 : index
    %c0_4 = arith.constant 0 : index
    %2 = vector.load %arg2[%c0_3, %c0_4] : memref<32x256xf32, #tpu.memory_space<vmem>>, vector<32x128xf32>
    %3 = arith.mulf %2, %2 : vector<32x128xf32>
    %cst = arith.constant dense<0.000000e+00> : vector<32x64xf32>
    %4 = tpu.matmul %3, %0, %cst {dimension_numbers = #tpu.dot_dimension_numbers<[1], [0], [0], [1], [0, 0, 1, 1], [], []>} : vector<32x128xf32>, vector<128x64xf32>, vector<32x64xf32> -> vector<32x64xf32>
    %5 = math.absf %4 : vector<32x64xf32>
    %6 = math.sqrt %5 : vector<32x64xf32>
    %c0_5 = arith.constant 0 : index
    %c0_6 = arith.constant 0 : index
    %c0_7 = arith.constant 0 : index
    %7 = vector.load %arg3[%c0_5, %c0_6, %c0_7] : memref<1x1x128xf32, #tpu.memory_space<vmem>>, vector<1x1x64xf32>
    %8 = vector.shape_cast %7 : vector<1x1x64xf32> to vector<1x64xf32>
    %cst_8 = arith.constant 1.000000e+00 : f32
    %9 = vector.broadcast %cst_8 : f32 to vector<32x64xf32>
    %10 = arith.subf %6, %9 : vector<32x64xf32>
    %11 = vector.broadcast %8 : vector<1x64xf32> to vector<32x64xf32>
    %12 = arith.mulf %11, %10 : vector<32x64xf32>
    %cst_9 = arith.constant 1.00000095 : f32
    %13 = vector.broadcast %cst_9 : f32 to vector<32x64xf32>
    %14 = arith.addf %12, %13 : vector<32x64xf32>
    %15 = tpu.reciprocal %14 {approx = true} : vector<32x64xf32> -> vector<32x64xf32>
    %16 = arith.mulf %14, %15 : vector<32x64xf32>
    %cst_10 = arith.constant 2.000000e+00 : f32
    %17 = vector.broadcast %cst_10 : f32 to vector<32x64xf32>
    %18 = arith.subf %17, %16 : vector<32x64xf32>
    %19 = arith.mulf %15, %18 : vector<32x64xf32>
    %cst_11 = arith.constant dense<0.000000e+00> : vector<32x128xf32>
    %20 = tpu.matmul %19, %1, %cst_11 {dimension_numbers = #tpu.dot_dimension_numbers<[1], [0], [0], [1], [0, 0, 1, 1], [], []>} : vector<32x64xf32>, vector<64x128xf32>, vector<32x128xf32> -> vector<32x128xf32>
    %21 = arith.mulf %2, %20 : vector<32x128xf32>
    %c0_12 = arith.constant 0 : index
    %c0_13 = arith.constant 0 : index
    %22 = vector.load %arg6[%c0_12, %c0_13] : memref<32x256xf32, #tpu.memory_space<vmem>>, vector<32x128xf32>
    tpu.vector_store %arg6[%c0_12, %c0_13], %21 {strides = array<i32>} : memref<32x256xf32, #tpu.memory_space<vmem>>, vector<32x128xf32>,
    %c0_14 = arith.constant 0 : index
    %c128 = arith.constant 128 : index
    %23 = vector.load %arg2[%c0_14, %c128] : memref<32x256xf32, #tpu.memory_space<vmem>>, vector<32x128xf32>
    %24 = arith.mulf %23, %23 : vector<32x128xf32>
    %cst_15 = arith.constant dense<0.000000e+00> : vector<32x64xf32>
    %25 = tpu.matmul %24, %0, %cst_15 {dimension_numbers = #tpu.dot_dimension_numbers<[1], [0], [0], [1], [0, 0, 1, 1], [], []>} : vector<32x128xf32>, vector<128x64xf32>, vector<32x64xf32> -> vector<32x64xf32>
    %26 = math.absf %25 : vector<32x64xf32>
    %27 = math.sqrt %26 : vector<32x64xf32>
    %c0_16 = arith.constant 0 : index
    %c0_17 = arith.constant 0 : index
    %c64 = arith.constant 64 : index
    %28 = vector.load %arg3[%c0_16, %c0_17, %c64] : memref<1x1x128xf32, #tpu.memory_space<vmem>>, vector<1x1x64xf32>
    %29 = vector.shape_cast %28 : vector<1x1x64xf32> to vector<1x64xf32>
    %cst_18 = arith.constant 1.000000e+00 : f32
    %30 = vector.broadcast %cst_18 : f32 to vector<32x64xf32>
    %31 = arith.subf %27, %30 : vector<32x64xf32>
    %32 = vector.broadcast %29 : vector<1x64xf32> to vector<32x64xf32>
    %33 = arith.mulf %32, %31 : vector<32x64xf32>
    %cst_19 = arith.constant 1.00000095 : f32
    %34 = vector.broadcast %cst_19 : f32 to vector<32x64xf32>
    %35 = arith.addf %33, %34 : vector<32x64xf32>
    %36 = tpu.reciprocal %35 {approx = true} : vector<32x64xf32> -> vector<32x64xf32>
    %37 = arith.mulf %35, %36 : vector<32x64xf32>
    %cst_20 = arith.constant 2.000000e+00 : f32
    %38 = vector.broadcast %cst_20 : f32 to vector<32x64xf32>
    %39 = arith.subf %38, %37 : vector<32x64xf32>
    %40 = arith.mulf %36, %39 : vector<32x64xf32>
    %cst_21 = arith.constant dense<0.000000e+00> : vector<32x128xf32>
    %41 = tpu.matmul %40, %1, %cst_21 {dimension_numbers = #tpu.dot_dimension_numbers<[1], [0], [0], [1], [0, 0, 1, 1], [], []>} : vector<32x64xf32>, vector<64x128xf32>, vector<32x128xf32> -> vector<32x128xf32>
    %42 = arith.mulf %23, %41 : vector<32x128xf32>
    %c0_22 = arith.constant 0 : index
    %c128_23 = arith.constant 128 : index
    %43 = vector.load %arg6[%c0_22, %c128_23] : memref<32x256xf32, #tpu.memory_space<vmem>>, vector<32x128xf32>
    tpu.vector_store %arg6[%c0_22, %c128_23], %42 {strides = array<i32>} : memref<32x256xf32, #tpu.memory_space<vmem>>, vector<32x128xf32>,
    return
  }
  func.func @transform_0(%arg0: i32, %arg1: i32) -> (i32, i32) {
    %c0_i32 = arith.constant 0 : i32
    return %arg0, %arg1 : i32, i32
  }
  func.func @transform_1(%arg0: i32, %arg1: i32) -> (i32, i32, i32) {
    %c0_i32 = arith.constant 0 : i32
    %c0_i32_0 = arith.constant 0 : i32
    %c0_i32_1 = arith.constant 0 : i32
    return %arg1, %c0_i32, %c0_i32_0 : i32, i32, i32
  }
  func.func @transform_2(%arg0: i32, %arg1: i32) -> (i32, i32) {
    %c0_i32 = arith.constant 0 : i32
    %c0_i32_0 = arith.constant 0 : i32
    %c0_i32_1 = arith.constant 0 : i32
    return %c0_i32, %c0_i32_0 : i32, i32
  }
  func.func @transform_3(%arg0: i32, %arg1: i32) -> (i32, i32) {
    %c0_i32 = arith.constant 0 : i32
    %c0_i32_0 = arith.constant 0 : i32
    %c0_i32_1 = arith.constant 0 : i32
    return %c0_i32, %c0_i32_0 : i32, i32
  }
  func.func @transform_4(%arg0: i32, %arg1: i32) -> (i32, i32) {
    %c0_i32 = arith.constant 0 : i32
    return %arg0, %arg1 : i32, i32
  }
}

</mosaic_0001>

<llo_original>
// kernel: tpu_custom_call.1
$region0: #{tpu_custom_call.1}
  #allocation0 [shape = 'u32[]', space=smem, size = 0x4, offset = 0x4, fixed_abs, tag = 'smem constant byte address 0x4 - core index']
  #allocation1 [shape = 'u32[144,128]{1,0:T(1,128)}', space=vmem, size = 0x12000, scoped, tag = 'internal scratch']
  %s0 = inlined_call_operand.vmem [shape: f32[32,512], index: 0, kind: input, shape index: {}]
  %s1 = inlined_call_operand.vmem [shape: f32[2,1,128], index: 1, kind: input, shape index: {}]
  %s2 = inlined_call_operand.vmem [shape: f32[128,64], index: 2, kind: input, shape index: {}]
  %s3 = inlined_call_operand.vmem [shape: f32[64,128], index: 3, kind: input, shape index: {}]
  %s4 = inlined_call_operand.hbm [shape: f32[32,512], index: 4, kind: output, shape index: {}]
  %s5 = sld [smem:[#allocation0]]
  $region72: #{tpu_custom_call.1} parent=0
    _
  %s7 = ssub.s32 1, %s5
  %s8 = scalar_select 0, %s7, %s5
  $region1: #{tpu_custom_call.1} parent=0
    #allocation2 [shape = 'u8[65536]{0}', space=vmem, size = 0x10000, scoped, tag = 'input window, operand 0']
    #allocation3 [shape = 'u8[65536]{0}', space=vmem, size = 0x10000, scoped, tag = 'output window, operand 0']
    #allocation4 [shape = 's32[2]{0}', space=sflag, size = 0x8, scoped, tag = 'scoped memory for tpu_custom_call.1']
    %9 = vsyncpa [#allocation4], 0
    %s10 = scalar_lea.sflag [#allocation4], 1
    %11 = vsyncpa %s10, 0
    loop: start=0, step=1, limit=4
    $region2: #{tpu_custom_call.1} parent=1 // loop_pre_header
      _
    $region3: #{tpu_custom_call.1} parent=1 // loop_header
      %s13 = sphi 0, %s17
      %p14 = scmp.ge.s32.totalorder %s13, 4
      %s20 = sphi 0, %s32
      %s21 = sphi 0, %s28
      %s22 = sphi 0, %s20
      %s23 = sphi 0, %s21
      %s24 = sphi 0, %s22
      %s25 = sphi 0, %s23
      %s37 = sphi 0, %s39
      %s40 = sphi 0, %s37
      %s41 = sphi 0, %s40
      %s57 = sphi 0, %s41
      %s63 = sphi 0, %s65
      %s66 = sphi 0, %s63
      %s67 = sphi 0, %s66
      %s83 = sphi 0, %s67
      %s87 = sphi 0, %s87
      %s89 = sphi 0, %s87
      %s90 = sphi 0, %s89
      %s104 = sphi 0, %s90
      %s108 = sphi 0, %s108
      %s110 = sphi 0, %s108
      %s111 = sphi 0, %s110
      %s125 = sphi 0, %s111
      %s133 = sphi 0, %s135
      %s136 = sphi 0, %s133
      %s137 = sphi 0, %s136
      %s153 = sphi 0, %s137
    $region4: #{tpu_custom_call.1} parent=1 // loop_header_branch
      %16 = sbr.rel (%p14) target = $region8
    $region5: #{tpu_custom_call.1} parent=1 // loop_body
      %s18 = ssub.s32 %s13, 1
      %s19 = ssub.s32 %s13, 2
      %s26 = sadd.s32 1, %s21
      %p27 = scmp.ge.s32.totalorder %s26, 2
      %s28 = scalar_select %p27, 0, %s26
      %s29 = sadd.s32 1, %s20
      %s30 = scalar_select %p27, %s29, %s20
      %p31 = scmp.ge.s32.totalorder %s30, 1
      %s32 = scalar_select %p31, 0, %s30
      %s33 = ssub.s32 %s20, %s32
      %s34 = ssub.s32 %s21, %s28
      %s35 = sor.u32 %s33, %s34
      %p36 = scmp.eq.s32.totalorder %s35, 0
      %s38 = sadd.s32 %s37, 1
      %s39 = scalar_select %p36, %s37, %s38
      %p42 = pneg %p36
      %p43 = scmp.eq.s32.totalorder %s13, 1
      %p44 = por %p42, %p43
      %p45 = scmp.ne.s32.totalorder %s37, %s40
      %p46 = scmp.eq.s32.totalorder %s13, 0
      %p47 = por %p45, %p46
      %p48 = scmp.ne.s32.totalorder %s37, %s40
      %p49 = scmp.eq.s32.totalorder %s18, 1
      %p50 = por %p48, %p49
      %p51 = scmp.ne.s32.totalorder %s40, %s41
      %p52 = scmp.eq.s32.totalorder %s18, 0
      %p53 = por %p51, %p52
      %p54 = scmp.ne.s32.totalorder %s40, %s41
      %p55 = scmp.eq.s32.totalorder %s19, 1
      %p56 = por %p54, %p55
      %p58 = scmp.ne.s32.totalorder %s41, %s57
      %p59 = scmp.eq.s32.totalorder %s19, 0
      %p60 = por %p58, %p59
      %s61 = ssub.s32 %s21, %s28
      %p62 = scmp.eq.s32.totalorder %s61, 0
      %s64 = sadd.s32 %s63, 1
      %s65 = scalar_select %p62, %s63, %s64
      %p68 = pneg %p62
      %p69 = scmp.eq.s32.totalorder %s13, 1
      %p70 = por %p68, %p69
      %p71 = scmp.ne.s32.totalorder %s63, %s66
      %p72 = scmp.eq.s32.totalorder %s13, 0
      %p73 = por %p71, %p72
      %p74 = scmp.ne.s32.totalorder %s63, %s66
      %p75 = scmp.eq.s32.totalorder %s18, 1
      %p76 = por %p74, %p75
      %p77 = scmp.ne.s32.totalorder %s66, %s67
      %p78 = scmp.eq.s32.totalorder %s18, 0
      %p79 = por %p77, %p78
      %p80 = scmp.ne.s32.totalorder %s66, %s67
      %p81 = scmp.eq.s32.totalorder %s19, 1
      %p82 = por %p80, %p81
      %p84 = scmp.ne.s32.totalorder %s67, %s83
      %p85 = scmp.eq.s32.totalorder %s19, 0
      %p86 = por %p84, %p85
      %s88 = sadd.s32 %s87, 1
      %p91 = scmp.eq.s32.totalorder %s13, 1
      %p92 = scmp.ne.s32.totalorder %s87, %s89
      %p93 = scmp.eq.s32.totalorder %s13, 0
      %p94 = por %p92, %p93
      %p95 = scmp.ne.s32.totalorder %s87, %s89
      %p96 = scmp.eq.s32.totalorder %s18, 1
      %p97 = por %p95, %p96
      %p98 = scmp.ne.s32.totalorder %s89, %s90
      %p99 = scmp.eq.s32.totalorder %s18, 0
      %p100 = por %p98, %p99
      %p101 = scmp.ne.s32.totalorder %s89, %s90
      %p102 = scmp.eq.s32.totalorder %s19, 1
      %p103 = por %p101, %p102
      %p105 = scmp.ne.s32.totalorder %s90, %s104
      %p106 = scmp.eq.s32.totalorder %s19, 0
      %p107 = por %p105, %p106
      %s109 = sadd.s32 %s108, 1
      %p112 = scmp.eq.s32.totalorder %s13, 1
      %p113 = scmp.ne.s32.totalorder %s108, %s110
      %p114 = scmp.eq.s32.totalorder %s13, 0
      %p115 = por %p113, %p114
      %p116 = scmp.ne.s32.totalorder %s108, %s110
      %p117 = scmp.eq.s32.totalorder %s18, 1
      %p118 = por %p116, %p117
      %p119 = scmp.ne.s32.totalorder %s110, %s111
      %p120 = scmp.eq.s32.totalorder %s18, 0
      %p121 = por %p119, %p120
      %p122 = scmp.ne.s32.totalorder %s110, %s111
      %p123 = scmp.eq.s32.totalorder %s19, 1
      %p124 = por %p122, %p123
      %p126 = scmp.ne.s32.totalorder %s111, %s125
      %p127 = scmp.eq.s32.totalorder %s19, 0
      %p128 = por %p126, %p127
      %s129 = ssub.s32 %s20, %s32
      %s130 = ssub.s32 %s21, %s28
      %s131 = sor.u32 %s129, %s130
      %p132 = scmp.eq.s32.totalorder %s131, 0
      %s134 = sadd.s32 %s133, 1
      %s135 = scalar_select %p132, %s133, %s134
      %p138 = pneg %p132
      %p139 = scmp.eq.s32.totalorder %s13, 1
      %p140 = por %p138, %p139
      %p141 = scmp.ne.s32.totalorder %s133, %s136
      %p142 = scmp.eq.s32.totalorder %s13, 0
      %p143 = por %p141, %p142
      %p144 = scmp.ne.s32.totalorder %s133, %s136
      %p145 = scmp.eq.s32.totalorder %s18, 1
      %p146 = por %p144, %p145
      %p147 = scmp.ne.s32.totalorder %s136, %s137
      %p148 = scmp.eq.s32.totalorder %s18, 0
      %p149 = por %p147, %p148
      %p150 = scmp.ne.s32.totalorder %s136, %s137
      %p151 = scmp.eq.s32.totalorder %s19, 1
      %p152 = por %p150, %p151
      %p154 = scmp.ne.s32.totalorder %s137, %s153
      %p155 = scmp.eq.s32.totalorder %s19, 0
      %p156 = por %p154, %p155
      %p157 = scmp.le.s32.totalorder 1, %s13
      %p158 = scmp.lt.s32.totalorder %s13, 3
      %p159 = pnand %p157, %p158
      %p160 = pneg %p159
      // Predicated region
      $region9: #{tpu_custom_call.1} parent=5 // pred_check
        _
      $region10: #{tpu_custom_call.1} parent=5 // pred_check_branch
        %162 = sbr.rel (%p159) target = $region12
      $region11: #{tpu_custom_call.1} parent=5 // pred_region
        %s163 = ssub.s32 %s13, 1
        // Predicated region
        $region13: #{tpu_custom_call.1} parent=11 // pred_check
          %p164 = pneg %p100
        $region14: #{tpu_custom_call.1} parent=11 // pred_check_branch
          %166 = sbr.rel (%p164) target = $region16
        $region15: #{tpu_custom_call.1} parent=11 // pred_region
          _
        $region16: #{tpu_custom_call.1} parent=11 // pred_fallthru
          _
        // Predicated region
        $region17: #{tpu_custom_call.1} parent=11 // pred_check
          %p167 = pneg %p121
        $region18: #{tpu_custom_call.1} parent=11 // pred_check_branch
          %169 = sbr.rel (%p167) target = $region20
        $region19: #{tpu_custom_call.1} parent=11 // pred_region
          _
        $region20: #{tpu_custom_call.1} parent=11 // pred_fallthru
          _
      $region12: #{tpu_custom_call.1} parent=5 // pred_fallthru
        _
      %p170 = scmp.lt.s32.totalorder %s13, 2
      // Predicated region
      $region21: #{tpu_custom_call.1} parent=5 // pred_check
        %p171 = pneg %p170
      $region22: #{tpu_custom_call.1} parent=5 // pred_check_branch
        %173 = sbr.rel (%p171) target = $region24
      $region23: #{tpu_custom_call.1} parent=5 // pred_region
        // Predicated region
        $region25: #{tpu_custom_call.1} parent=23 // pred_check
          %p174 = pneg %p47
        $region26: #{tpu_custom_call.1} parent=23 // pred_check_branch
          %176 = sbr.rel (%p174) target = $region28
        $region27: #{tpu_custom_call.1} parent=23 // pred_region
          %s177 = sand.u32 %s37, 1
          %s178 = sand.u32 %s37, 1
          %s179 = smul.addr %s178, 64
          %s180 = scalar_lea.vmem [#allocation2], %s179
          %s181 = smul.u32 4, %s20
          %s182 = smul.u32 2, %s21
          %s183 = smul.addr %s181, 4
          %s184 = sadd.s32 %s182, %s183
          %s185 = smul.addr %s184, 8
          %s186 = scalar_lea.vmem %s0, %s185
          // Predicated region
          $region29: #{tpu_custom_call.1} parent=27 // pred_check
            _
          $region30: #{tpu_custom_call.1} parent=27 // pred_check_branch
            %188 = sbr.rel (0) target = $region32
          $region31: #{tpu_custom_call.1} parent=27 // pred_region
            // Predicated region
            $region33: #{tpu_custom_call.1} parent=31 // pred_check
              _
            $region34: #{tpu_custom_call.1} parent=31 // pred_check_branch
              %190 = sbr.rel (0) target = $region36
            $region35: #{tpu_custom_call.1} parent=31 // pred_region
              loop: start=0, step=1, limit=1
              $region37: #{tpu_custom_call.1} parent=35 // loop_pre_header
                _
              $region38: #{tpu_custom_call.1} parent=35 // loop_header
                %s192 = sphi 0, %s196
                %p193 = scmp.ge.s32.totalorder %s192, 1
                %s197 = sphi %s186, %s186
                %s198 = sphi %s180, %s180
              $region39: #{tpu_custom_call.1} parent=35 // loop_header_branch
                %195 = sbr.rel (%p193) target = $region43
              $region40: #{tpu_custom_call.1} parent=35 // loop_body
                %v199 = vld [vmem:[%s197] sm:$0xff]
                %200 = vst [vmem:[%s198] sm:$0xff] %v199
                %v201 = vld [vmem:[%s197 + $0x8] sm:$0xff]
                %202 = vst [vmem:[%s198 + $0x8] sm:$0xff] %v201
                %v203 = vld [vmem:[%s197 + $0x20] sm:$0xff]
                %204 = vst [vmem:[%s198 + $0x10] sm:$0xff] %v203
                %v205 = vld [vmem:[%s197 + $0x28] sm:$0xff]
                %206 = vst [vmem:[%s198 + $0x18] sm:$0xff] %v205
                %v207 = vld [vmem:[%s197 + $0x40] sm:$0xff]
                %208 = vst [vmem:[%s198 + $0x20] sm:$0xff] %v207
                %v209 = vld [vmem:[%s197 + $0x48] sm:$0xff]
                %210 = vst [vmem:[%s198 + $0x28] sm:$0xff] %v209
                %v211 = vld [vmem:[%s197 + $0x60] sm:$0xff]
                %212 = vst [vmem:[%s198 + $0x30] sm:$0xff] %v211
                %v213 = vld [vmem:[%s197 + $0x68] sm:$0xff]
                %214 = vst [vmem:[%s198 + $0x38] sm:$0xff] %v213
              $region41: #{tpu_custom_call.1} parent=35 // loop_footer
                %s196 = sadd.s32 1, %s192
              $region42: #{tpu_custom_call.1} parent=35 // loop_footer_branch
                %191 = sbr.rel target = $region38
              $region43: #{tpu_custom_call.1} parent=35 // loop_exit
                _
            $region36: #{tpu_custom_call.1} parent=31 // pred_fallthru
              _
            // Predicated region
            $region44: #{tpu_custom_call.1} parent=31 // pred_check
              _
            $region45: #{tpu_custom_call.1} parent=31 // pred_check_branch
              %216 = sbr.rel target = $region47
            $region46: #{tpu_custom_call.1} parent=31 // pred_region
              _
            $region47: #{tpu_custom_call.1} parent=31 // pred_fallthru
              _
          $region32: #{tpu_custom_call.1} parent=27 // pred_fallthru
            _
          %217 = vnop
        $region28: #{tpu_custom_call.1} parent=23 // pred_fallthru
          _
        // Predicated region
        $region48: #{tpu_custom_call.1} parent=23 // pred_check
          %p218 = pneg %p73
        $region49: #{tpu_custom_call.1} parent=23 // pred_check_branch
          %220 = sbr.rel (%p218) target = $region51
        $region50: #{tpu_custom_call.1} parent=23 // pred_region
          %p221 = scmp.lt.s32.totalorder %s21, 1
          %s222 = scalar_select %p221, %s21, 1
          %s223 = scalar_lea.vmem %s1, %s222
        $region51: #{tpu_custom_call.1} parent=23 // pred_fallthru
          _
      $region24: #{tpu_custom_call.1} parent=5 // pred_fallthru
        _
      %p224 = scmp.le.s32.totalorder 1, %s13
      %p225 = scmp.lt.s32.totalorder %s13, 3
      %p226 = pnand %p224, %p225
      %p227 = pneg %p226
      // Predicated region
      $region52: #{tpu_custom_call.1} parent=5 // pred_check
        _
      $region53: #{tpu_custom_call.1} parent=5 // pred_check_branch
        %229 = sbr.rel (%p226) target = $region55
      $region54: #{tpu_custom_call.1} parent=5 // pred_region
        %s230 = ssub.s32 %s13, 1
        %s231 = sand.u32 %s40, 1
        %s232 = sand.u32 %s40, 1
        %s233 = smul.addr %s232, 64
        %s234 = scalar_lea.vmem [#allocation2], %s233
        // Predicated region
        $region56: #{tpu_custom_call.1} parent=54 // pred_check
          %p235 = pneg %p53
        $region57: #{tpu_custom_call.1} parent=54 // pred_check_branch
          %237 = sbr.rel (%p235) target = $region59
        $region58: #{tpu_custom_call.1} parent=54 // pred_region
          _
        $region59: #{tpu_custom_call.1} parent=54 // pred_fallthru
          _
        %s238 = sand.u32 %s40, 1
        %s239 = sand.u32 %s40, 1
        %s240 = smul.addr %s239, 64
        %s241 = scalar_lea.vmem [#allocation2], %s240
        %p242 = pneg %p53
        %p243 = pneg %p50
        %p244 = scmp.lt.s32.totalorder %s23, 1
        %s245 = scalar_select %p244, %s23, 1
        %s246 = scalar_lea.vmem %s1, %s245
        %p247 = pneg %p79
        %p248 = pneg %p76
        %p249 = pneg %p100
        %p250 = pneg %p97
        %p251 = pneg %p121
        %p252 = pneg %p118
        %p253 = pneg %p149
        %p254 = pneg %p146
        %s255 = sand.u32 %s136, 1
        %s256 = scalar_lea.sflag [#allocation4], %s255
        %s257 = sand.u32 %s136, 1
        %s258 = smul.addr %s257, 64
        %s259 = scalar_lea.vmem [#allocation3], %s258
        %s260 = smul.u32 4, %s22
        %s261 = smul.u32 2, %s23
        %p262 = scmp.lt.s32.totalorder %s23, 1
        %s263 = scalar_select %p262, %s23, 1
        %s264 = scalar_lea.vmem %s1, %s263
        %s265 = smul.u32 4, %s22
        %s266 = smul.u32 2, %s23
        %v267 = vld [vmem:[%s2] sm:$0xff]
        %v268 = vld [vmem:[%s2 + $0x8] sm:$0xff]
        %v269 = vld [vmem:[%s2 + $0x10] sm:$0xff]
        %v270 = vld [vmem:[%s2 + $0x18] sm:$0xff]
        %v271 = vld [vmem:[%s2 + $0x20] sm:$0xff]
        %v272 = vld [vmem:[%s2 + $0x28] sm:$0xff]
        %v273 = vld [vmem:[%s2 + $0x30] sm:$0xff]
        %v274 = vld [vmem:[%s2 + $0x38] sm:$0xff]
        %v275 = vld [vmem:[%s2 + $0x40] sm:$0xff]
        %v276 = vld [vmem:[%s2 + $0x48] sm:$0xff]
        %v277 = vld [vmem:[%s2 + $0x50] sm:$0xff]
        %v278 = vld [vmem:[%s2 + $0x58] sm:$0xff]
        %v279 = vld [vmem:[%s2 + $0x60] sm:$0xff]
        %v280 = vld [vmem:[%s2 + $0x68] sm:$0xff]
        %v281 = vld [vmem:[%s2 + $0x70] sm:$0xff]
        %v282 = vld [vmem:[%s2 + $0x78] sm:$0xff]
        %v283 = vld [vmem:[%s3] sm:$0xff]
        %v284 = vld [vmem:[%s3 + $0x8] sm:$0xff]
        %v285 = vld [vmem:[%s3 + $0x10] sm:$0xff]
        %v286 = vld [vmem:[%s3 + $0x18] sm:$0xff]
        %v287 = vld [vmem:[%s3 + $0x20] sm:$0xff]
        %v288 = vld [vmem:[%s3 + $0x28] sm:$0xff]
        %v289 = vld [vmem:[%s3 + $0x30] sm:$0xff]
        %v290 = vld [vmem:[%s3 + $0x38] sm:$0xff]
        %v291 = vld [vmem:[%s234] sm:$0xff]
        %v292 = vld [vmem:[%s234 + $0x10] sm:$0xff]
        %v293 = vld [vmem:[%s234 + $0x20] sm:$0xff]
        %v294 = vld [vmem:[%s234 + $0x30] sm:$0xff]
        %v295 = vmul.f32 %v291, %v291
        %v296 = vmul.f32 %v292, %v292
        %v297 = vmul.f32 %v293, %v293
        %v298 = vmul.f32 %v294, %v294
        %299 = vmatprep.subr.mxu0 0.0
        %300 = vmatpush1.msra.mxu0 %v267
        %301 = vmatprep.subr.mxu0 0.0
        %302 = vmatpush1.msra.mxu0 %v268
        %303 = vmatprep.subr.mxu0 0.0
        %304 = vmatpush1.msra.mxu0 %v269
        %305 = vmatprep.subr.mxu0 0.0
        %306 = vmatpush1.msra.mxu0 %v270
        %307 = vmatprep.subr.mxu0 0.0
        %308 = vmatpush1.msra.mxu0 %v271
        %309 = vmatprep.subr.mxu0 0.0
        %310 = vmatpush1.msra.mxu0 %v272
        %311 = vmatprep.subr.mxu0 0.0
        %312 = vmatpush1.msra.mxu0 %v273
        %313 = vmatprep.subr.mxu0 0.0
        %314 = vmatpush1.msra.mxu0 %v274
        %315 = vmatprep.subr.mxu0 0.0
        %316 = vmatpush1.msra.mxu0 %v275
        %317 = vmatprep.subr.mxu0 0.0
        %318 = vmatpush1.msra.mxu0 %v276
        %319 = vmatprep.subr.mxu0 0.0
        %320 = vmatpush1.msra.mxu0 %v277
        %321 = vmatprep.subr.mxu0 0.0
        %322 = vmatpush1.msra.mxu0 %v278
        %323 = vmatprep.subr.mxu0 0.0
        %324 = vmatpush1.msra.mxu0 %v279
        %325 = vmatprep.subr.mxu0 0.0
        %326 = vmatpush1.msra.mxu0 %v280
        %327 = vmatprep.subr.mxu0 0.0
        %328 = vmatpush1.msra.mxu0 %v281
        %329 = vmatprep.subr.mxu0 0.0
        %330 = vmatpush1.msra.mxu0 %v282
        %331 = vmatprep.subr.mxu0 0.0
        %332 = vmatpush1.msra.mxu0 0.0
        %333 = vmatprep.subr.mxu0 0.0
        %334 = vmatpush1.msra.mxu0 0.0
        %335 = vmatprep.subr.mxu0 0.0
        %336 = vmatpush1.msra.mxu0 0.0
        %337 = vmatprep.subr.mxu0 0.0
        %338 = vmatpush1.msra.mxu0 0.0
        %339 = vmatprep.subr.mxu0 0.0
        %340 = vmatpush1.msra.mxu0 0.0
        %341 = vmatprep.subr.mxu0 0.0
        %342 = vmatpush1.msra.mxu0 0.0
        %343 = vmatprep.subr.mxu0 0.0
        %344 = vmatpush1.msra.mxu0 0.0
        %345 = vmatprep.subr.mxu0 0.0
        %346 = vmatpush1.msra.mxu0 0.0
        %347 = vmatprep.subr.mxu0 0.0
        %348 = vmatpush1.msra.mxu0 0.0
        %349 = vmatprep.subr.mxu0 0.0
        %350 = vmatpush1.msra.mxu0 0.0
        %351 = vmatprep.subr.mxu0 0.0
        %352 = vmatpush1.msra.mxu0 0.0
        %353 = vmatprep.subr.mxu0 0.0
        %354 = vmatpush1.msra.mxu0 0.0
        %355 = vmatprep.subr.mxu0 0.0
        %356 = vmatpush1.msra.mxu0 0.0
        %357 = vmatprep.subr.mxu0 0.0
        %358 = vmatpush1.msra.mxu0 0.0
        %359 = vmatprep.subr.mxu0 0.0
        %360 = vmatpush1.msra.mxu0 0.0
        %361 = vmatprep.subr.mxu0 0.0
        %362 = vmatpush1.msra.mxu0 0.0
        %363 = vmatprep.mubr.f32.mxu0 0.0
        %364 = vmatmul.mubr.f32.gmra.mrb[0].mxu0 %v295
        %v365 = vpop.f32.mrb[0].mxu0
        %v366 = vadd.f32 0.0, %v365
        %v367 = vpop.f32.mrb[0].mxu0
        %368 = vmatprep.mubr.f32.mxu0 0.0
        %369 = vmatmul.mubr.f32.gmra.mrb[0].mxu0 %v296
        %v370 = vpop.f32.mrb[0].mxu0
        %v371 = vadd.f32 0.0, %v370
        %v372 = vpop.f32.mrb[0].mxu0
        %373 = vmatprep.mubr.f32.mxu0 0.0
        %374 = vmatmul.mubr.f32.gmra.mrb[0].mxu0 %v297
        %v375 = vpop.f32.mrb[0].mxu0
        %v376 = vadd.f32 0.0, %v375
        %v377 = vpop.f32.mrb[0].mxu0
        %378 = vmatprep.mubr.f32.mxu0 0.0
        %379 = vmatmul.mubr.f32.gmra.mrb[0].mxu0 %v298
        %v380 = vpop.f32.mrb[0].mxu0
        %v381 = vadd.f32 0.0, %v380
        %v382 = vpop.f32.mrb[0].mxu0
        %383 = vdwg.mxu0
        %v384 = vand.u32 2147483647, %v366
        %v385 = vand.u32 2147483647, %v371
        %v386 = vand.u32 2147483647, %v376
        %v387 = vand.u32 2147483647, %v381
        %v388 = vrsqrt.pop %v384
        %v389 = vmul.f32 %v384, %v388
        %vm390 = vcmp.eq.f32.partialorder %v384, inf
        %v391 = vsel %vm390, %v384, %v389
        %vm392 = vcmp.eq.f32.partialorder %v384, 0.0
        %v393 = vand.u32 %v384, 2147483648
        %v394 = vsel %vm392, %v393, %v391
        %v395 = vrsqrt.pop %v385
        %v396 = vmul.f32 %v385, %v395
        %vm397 = vcmp.eq.f32.partialorder %v385, inf
        %v398 = vsel %vm397, %v385, %v396
        %vm399 = vcmp.eq.f32.partialorder %v385, 0.0
        %v400 = vand.u32 %v385, 2147483648
        %v401 = vsel %vm399, %v400, %v398
        %v402 = vrsqrt.pop %v386
        %v403 = vmul.f32 %v386, %v402
        %vm404 = vcmp.eq.f32.partialorder %v386, inf
        %v405 = vsel %vm404, %v386, %v403
        %vm406 = vcmp.eq.f32.partialorder %v386, 0.0
        %v407 = vand.u32 %v386, 2147483648
        %v408 = vsel %vm406, %v407, %v405
        %v409 = vrsqrt.pop %v387
        %v410 = vmul.f32 %v387, %v409
        %vm411 = vcmp.eq.f32.partialorder %v387, inf
        %v412 = vsel %vm411, %v387, %v410
        %vm413 = vcmp.eq.f32.partialorder %v387, 0.0
        %v414 = vand.u32 %v387, 2147483648
        %v415 = vsel %vm413, %v414, %v412
        %v416 = vld [vmem:[%s264] sm:$0x1]
        %v417 = vsub.f32 %v394, 1.0
        %v418 = vsub.f32 %v401, 1.0
        %v419 = vsub.f32 %v408, 1.0
        %v420 = vsub.f32 %v415, 1.0
        %v422 = vlaneseq
        %v423 = vshrl.u32 %v422, 7
        %v424 = vsub.s32 0, %v423
        %v425 = vrot.slane %v416, %v424
        %v427 = vmul.f32 %v425, %v417
        %v428 = vmul.f32 %v425, %v418
        %v429 = vmul.f32 %v425, %v419
        %v430 = vmul.f32 %v425, %v420
        %v431 = vadd.f32 %v427, 1.000001
        %v432 = vadd.f32 %v428, 1.000001
        %v433 = vadd.f32 %v429, 1.000001
        %v434 = vadd.f32 %v430, 1.000001
        %v435 = vrcp.pop %v431
        %v436 = vrcp.pop %v432
        %v437 = vrcp.pop %v433
        %v438 = vrcp.pop %v434
        %v439 = vmul.f32 %v431, %v435
        %v440 = vmul.f32 %v432, %v436
        %v441 = vmul.f32 %v433, %v437
        %v442 = vmul.f32 %v434, %v438
        %v443 = vsub.f32 2.0, %v439
        %v444 = vsub.f32 2.0, %v440
        %v445 = vsub.f32 2.0, %v441
        %v446 = vsub.f32 2.0, %v442
        %v447 = vmul.f32 %v435, %v443
        %v448 = vmul.f32 %v436, %v444
        %v449 = vmul.f32 %v437, %v445
        %v450 = vmul.f32 %v438, %v446
        %vm451 = vcmask 523264
        %v453 = vsel %vm451, %v447, 0
        %v456 = vsel %vm451, %v448, 0
        %v459 = vsel %vm451, %v449, 0
        %v462 = vsel %vm451, %v450, 0
        %464 = vmatprep.subr.mxu0 0.0
        %465 = vmatpush1.msra.mxu0 %v283
        %466 = vmatprep.subr.mxu0 0.0
        %467 = vmatpush1.msra.mxu0 %v284
        %468 = vmatprep.subr.mxu0 0.0
        %469 = vmatpush1.msra.mxu0 %v285
        %470 = vmatprep.subr.mxu0 0.0
        %471 = vmatpush1.msra.mxu0 %v286
        %472 = vmatprep.subr.mxu0 0.0
        %473 = vmatpush1.msra.mxu0 %v287
        %474 = vmatprep.subr.mxu0 0.0
        %475 = vmatpush1.msra.mxu0 %v288
        %476 = vmatprep.subr.mxu0 0.0
        %477 = vmatpush1.msra.mxu0 %v289
        %478 = vmatprep.subr.mxu0 0.0
        %479 = vmatpush1.msra.mxu0 %v290
        %480 = vmatprep.subr.mxu0 0.0
        %481 = vmatpush1.msra.mxu0 0.0
        %482 = vmatprep.subr.mxu0 0.0
        %483 = vmatpush1.msra.mxu0 0.0
        %484 = vmatprep.subr.mxu0 0.0
        %485 = vmatpush1.msra.mxu0 0.0
        %486 = vmatprep.subr.mxu0 0.0
        %487 = vmatpush1.msra.mxu0 0.0
        %488 = vmatprep.subr.mxu0 0.0
        %489 = vmatpush1.msra.mxu0 0.0
        %490 = vmatprep.subr.mxu0 0.0
        %491 = vmatpush1.msra.mxu0 0.0
        %492 = vmatprep.subr.mxu0 0.0
        %493 = vmatpush1.msra.mxu0 0.0
        %494 = vmatprep.subr.mxu0 0.0
        %495 = vmatpush1.msra.mxu0 0.0
        %496 = vmatprep.subr.mxu0 0.0
        %497 = vmatpush1.msra.mxu0 0.0
        %498 = vmatprep.subr.mxu0 0.0
        %499 = vmatpush1.msra.mxu0 0.0
        %500 = vmatprep.subr.mxu0 0.0
        %501 = vmatpush1.msra.mxu0 0.0
        %502 = vmatprep.subr.mxu0 0.0
        %503 = vmatpush1.msra.mxu0 0.0
        %504 = vmatprep.subr.mxu0 0.0
        %505 = vmatpush1.msra.mxu0 0.0
        %506 = vmatprep.subr.mxu0 0.0
        %507 = vmatpush1.msra.mxu0 0.0
        %508 = vmatprep.subr.mxu0 0.0
        %509 = vmatpush1.msra.mxu0 0.0
        %510 = vmatprep.subr.mxu0 0.0
        %511 = vmatpush1.msra.mxu0 0.0
        %512 = vmatprep.subr.mxu0 0.0
        %513 = vmatpush1.msra.mxu0 0.0
        %514 = vmatprep.subr.mxu0 0.0
        %515 = vmatpush1.msra.mxu0 0.0
        %516 = vmatprep.subr.mxu0 0.0
        %517 = vmatpush1.msra.mxu0 0.0
        %518 = vmatprep.subr.mxu0 0.0
        %519 = vmatpush1.msra.mxu0 0.0
        %520 = vmatprep.subr.mxu0 0.0
        %521 = vmatpush1.msra.mxu0 0.0
        %522 = vmatprep.subr.mxu0 0.0
        %523 = vmatpush1.msra.mxu0 0.0
        %524 = vmatprep.subr.mxu0 0.0
        %525 = vmatpush1.msra.mxu0 0.0
        %526 = vmatprep.subr.mxu0 0.0
        %527 = vmatpush1.msra.mxu0 0.0
        %528 = vmatprep.mubr.f32.mxu0 0.0
        %529 = vmatmul.mubr.f32.gmra.mrb[0].mxu0 %v453
        %v530 = vpop.f32.mrb[0].mxu0
        %v531 = vadd.f32 0.0, %v530
        %v532 = vpop.f32.mrb[0].mxu0
        %533 = vmatprep.mubr.f32.mxu0 0.0
        %534 = vmatmul.mubr.f32.gmra.mrb[0].mxu0 %v456
        %v535 = vpop.f32.mrb[0].mxu0
        %v536 = vadd.f32 0.0, %v535
        %v537 = vpop.f32.mrb[0].mxu0
        %538 = vmatprep.mubr.f32.mxu0 0.0
        %539 = vmatmul.mubr.f32.gmra.mrb[0].mxu0 %v459
        %v540 = vpop.f32.mrb[0].mxu0
        %v541 = vadd.f32 0.0, %v540
        %v542 = vpop.f32.mrb[0].mxu0
        %543 = vmatprep.mubr.f32.mxu0 0.0
        %544 = vmatmul.mubr.f32.gmra.mrb[0].mxu0 %v462
        %v545 = vpop.f32.mrb[0].mxu0
        %v546 = vadd.f32 0.0, %v545
        %v547 = vpop.f32.mrb[0].mxu0
        %548 = vdwg.mxu0
        %v549 = vmul.f32 %v291, %v531
        %v550 = vmul.f32 %v292, %v536
        %v551 = vmul.f32 %v293, %v541
        %v552 = vmul.f32 %v294, %v546
        %553 = vst [vmem:[%s259] sm:$0xff] %v549
        %554 = vst [vmem:[%s259 + $0x10] sm:$0xff] %v550
        %555 = vst [vmem:[%s259 + $0x20] sm:$0xff] %v551
        %556 = vst [vmem:[%s259 + $0x30] sm:$0xff] %v552
        %v557 = vld [vmem:[%s234 + $0x8] sm:$0xff]
        %v558 = vld [vmem:[%s234 + $0x18] sm:$0xff]
        %v559 = vld [vmem:[%s234 + $0x28] sm:$0xff]
        %v560 = vld [vmem:[%s234 + $0x38] sm:$0xff]
        %v561 = vmul.f32 %v557, %v557
        %v562 = vmul.f32 %v558, %v558
        %v563 = vmul.f32 %v559, %v559
        %v564 = vmul.f32 %v560, %v560
        %565 = vmatprep.subr.mxu0 0.0
        %566 = vmatpush1.msra.mxu0 %v267
        %567 = vmatprep.subr.mxu0 0.0
        %568 = vmatpush1.msra.mxu0 %v268
        %569 = vmatprep.subr.mxu0 0.0
        %570 = vmatpush1.msra.mxu0 %v269
        %571 = vmatprep.subr.mxu0 0.0
        %572 = vmatpush1.msra.mxu0 %v270
        %573 = vmatprep.subr.mxu0 0.0
        %574 = vmatpush1.msra.mxu0 %v271
        %575 = vmatprep.subr.mxu0 0.0
        %576 = vmatpush1.msra.mxu0 %v272
        %577 = vmatprep.subr.mxu0 0.0
        %578 = vmatpush1.msra.mxu0 %v273
        %579 = vmatprep.subr.mxu0 0.0
        %580 = vmatpush1.msra.mxu0 %v274
        %581 = vmatprep.subr.mxu0 0.0
        %582 = vmatpush1.msra.mxu0 %v275
        %583 = vmatprep.subr.mxu0 0.0
        %584 = vmatpush1.msra.mxu0 %v276
        %585 = vmatprep.subr.mxu0 0.0
        %586 = vmatpush1.msra.mxu0 %v277
        %587 = vmatprep.subr.mxu0 0.0
        %588 = vmatpush1.msra.mxu0 %v278
        %589 = vmatprep.subr.mxu0 0.0
        %590 = vmatpush1.msra.mxu0 %v279
        %591 = vmatprep.subr.mxu0 0.0
        %592 = vmatpush1.msra.mxu0 %v280
        %593 = vmatprep.subr.mxu0 0.0
        %594 = vmatpush1.msra.mxu0 %v281
        %595 = vmatprep.subr.mxu0 0.0
        %596 = vmatpush1.msra.mxu0 %v282
        %597 = vmatprep.subr.mxu0 0.0
        %598 = vmatpush1.msra.mxu0 0.0
        %599 = vmatprep.subr.mxu0 0.0
        %600 = vmatpush1.msra.mxu0 0.0
        %601 = vmatprep.subr.mxu0 0.0
        %602 = vmatpush1.msra.mxu0 0.0
        %603 = vmatprep.subr.mxu0 0.0
        %604 = vmatpush1.msra.mxu0 0.0
        %605 = vmatprep.subr.mxu0 0.0
        %606 = vmatpush1.msra.mxu0 0.0
        %607 = vmatprep.subr.mxu0 0.0
        %608 = vmatpush1.msra.mxu0 0.0
        %609 = vmatprep.subr.mxu0 0.0
        %610 = vmatpush1.msra.mxu0 0.0
        %611 = vmatprep.subr.mxu0 0.0
        %612 = vmatpush1.msra.mxu0 0.0
        %613 = vmatprep.subr.mxu0 0.0
        %614 = vmatpush1.msra.mxu0 0.0
        %615 = vmatprep.subr.mxu0 0.0
        %616 = vmatpush1.msra.mxu0 0.0
        %617 = vmatprep.subr.mxu0 0.0
        %618 = vmatpush1.msra.mxu0 0.0
        %619 = vmatprep.subr.mxu0 0.0
        %620 = vmatpush1.msra.mxu0 0.0
        %621 = vmatprep.subr.mxu0 0.0
        %622 = vmatpush1.msra.mxu0 0.0
        %623 = vmatprep.subr.mxu0 0.0
        %624 = vmatpush1.msra.mxu0 0.0
        %625 = vmatprep.subr.mxu0 0.0
        %626 = vmatpush1.msra.mxu0 0.0
        %627 = vmatprep.subr.mxu0 0.0
        %628 = vmatpush1.msra.mxu0 0.0
        %629 = vmatprep.mubr.f32.mxu0 0.0
        %630 = vmatmul.mubr.f32.gmra.mrb[0].mxu0 %v561
        %v631 = vpop.f32.mrb[0].mxu0
        %v632 = vadd.f32 0.0, %v631
        %v633 = vpop.f32.mrb[0].mxu0
        %634 = vmatprep.mubr.f32.mxu0 0.0
        %635 = vmatmul.mubr.f32.gmra.mrb[0].mxu0 %v562
        %v636 = vpop.f32.mrb[0].mxu0
        %v637 = vadd.f32 0.0, %v636
        %v638 = vpop.f32.mrb[0].mxu0
        %639 = vmatprep.mubr.f32.mxu0 0.0
        %640 = vmatmul.mubr.f32.gmra.mrb[0].mxu0 %v563
        %v641 = vpop.f32.mrb[0].mxu0
        %v642 = vadd.f32 0.0, %v641
        %v643 = vpop.f32.mrb[0].mxu0
        %644 = vmatprep.mubr.f32.mxu0 0.0
        %645 = vmatmul.mubr.f32.gmra.mrb[0].mxu0 %v564
        %v646 = vpop.f32.mrb[0].mxu0
        %v647 = vadd.f32 0.0, %v646
        %v648 = vpop.f32.mrb[0].mxu0
        %649 = vdwg.mxu0
        %v650 = vand.u32 2147483647, %v632
        %v651 = vand.u32 2147483647, %v637
        %v652 = vand.u32 2147483647, %v642
        %v653 = vand.u32 2147483647, %v647
        %v654 = vrsqrt.pop %v650
        %v655 = vmul.f32 %v650, %v654
        %vm656 = vcmp.eq.f32.partialorder %v650, inf
        %v657 = vsel %vm656, %v650, %v655
        %vm658 = vcmp.eq.f32.partialorder %v650, 0.0
        %v659 = vand.u32 %v650, 2147483648
        %v660 = vsel %vm658, %v659, %v657
        %v661 = vrsqrt.pop %v651
        %v662 = vmul.f32 %v651, %v661
        %vm663 = vcmp.eq.f32.partialorder %v651, inf
        %v664 = vsel %vm663, %v651, %v662
        %vm665 = vcmp.eq.f32.partialorder %v651, 0.0
        %v666 = vand.u32 %v651, 2147483648
        %v667 = vsel %vm665, %v666, %v664
        %v668 = vrsqrt.pop %v652
        %v669 = vmul.f32 %v652, %v668
        %vm670 = vcmp.eq.f32.partialorder %v652, inf
        %v671 = vsel %vm670, %v652, %v669
        %vm672 = vcmp.eq.f32.partialorder %v652, 0.0
        %v673 = vand.u32 %v652, 2147483648
        %v674 = vsel %vm672, %v673, %v671
        %v675 = vrsqrt.pop %v653
        %v676 = vmul.f32 %v653, %v675
        %vm677 = vcmp.eq.f32.partialorder %v653, inf
        %v678 = vsel %vm677, %v653, %v676
        %vm679 = vcmp.eq.f32.partialorder %v653, 0.0
        %v680 = vand.u32 %v653, 2147483648
        %v681 = vsel %vm679, %v680, %v678
        %v682 = vld [vmem:[%s264] sm:$0x1]
        %v683 = vsub.f32 %v660, 1.0
        %v684 = vsub.f32 %v667, 1.0
        %v685 = vsub.f32 %v674, 1.0
        %v686 = vsub.f32 %v681, 1.0
        %v688 = vlaneseq
        %v689 = vshrl.u32 %v688, 7
        %v690 = vsub.s32 0, %v689
        %v691 = vrot.slane %v682, %v690
        %697 = vrot.lane.b32.xlu0 %v683, 64
        %v698 = vpop.permute.xlu0 %697
        %699 = vrot.lane.b32.xlu0 %v684, 64
        %v700 = vpop.permute.xlu0 %699
        %701 = vrot.lane.b32.xlu0 %v685, 64
        %v702 = vpop.permute.xlu0 %701
        %703 = vrot.lane.b32.xlu0 %v686, 64
        %v704 = vpop.permute.xlu0 %703
        %v709 = vmul.f32 %v691, %v698
        %v710 = vmul.f32 %v691, %v700
        %v711 = vmul.f32 %v691, %v702
        %v712 = vmul.f32 %v691, %v704
        %v713 = vadd.f32 %v709, 1.000001
        %v714 = vadd.f32 %v710, 1.000001
        %v715 = vadd.f32 %v711, 1.000001
        %v716 = vadd.f32 %v712, 1.000001
        %v717 = vrcp.pop %v713
        %v718 = vrcp.pop %v714
        %v719 = vrcp.pop %v715
        %v720 = vrcp.pop %v716
        %v721 = vmul.f32 %v713, %v717
        %v722 = vmul.f32 %v714, %v718
        %v723 = vmul.f32 %v715, %v719
        %v724 = vmul.f32 %v716, %v720
        %v725 = vsub.f32 2.0, %v721
        %v726 = vsub.f32 2.0, %v722
        %v727 = vsub.f32 2.0, %v723
        %v728 = vsub.f32 2.0, %v724
        %v729 = vmul.f32 %v717, %v725
        %v730 = vmul.f32 %v718, %v726
        %v731 = vmul.f32 %v719, %v727
        %v732 = vmul.f32 %v720, %v728
        %737 = vrot.lane.b32.xlu0 %v729, 64
        %v738 = vpop.permute.xlu0 %737
        %739 = vrot.lane.b32.xlu0 %v730, 64
        %v740 = vpop.permute.xlu0 %739
        %741 = vrot.lane.b32.xlu0 %v731, 64
        %v742 = vpop.permute.xlu0 %741
        %743 = vrot.lane.b32.xlu0 %v732, 64
        %v744 = vpop.permute.xlu0 %743
        %v745 = vsel %vm451, %v738, 0
        %v747 = vsel %vm451, %v740, 0
        %v749 = vsel %vm451, %v742, 0
        %v751 = vsel %vm451, %v744, 0
        %753 = vmatprep.subr.mxu0 0.0
        %754 = vmatpush1.msra.mxu0 %v283
        %755 = vmatprep.subr.mxu0 0.0
        %756 = vmatpush1.msra.mxu0 %v284
        %757 = vmatprep.subr.mxu0 0.0
        %758 = vmatpush1.msra.mxu0 %v285
        %759 = vmatprep.subr.mxu0 0.0
        %760 = vmatpush1.msra.mxu0 %v286
        %761 = vmatprep.subr.mxu0 0.0
        %762 = vmatpush1.msra.mxu0 %v287
        %763 = vmatprep.subr.mxu0 0.0
        %764 = vmatpush1.msra.mxu0 %v288
        %765 = vmatprep.subr.mxu0 0.0
        %766 = vmatpush1.msra.mxu0 %v289
        %767 = vmatprep.subr.mxu0 0.0
        %768 = vmatpush1.msra.mxu0 %v290
        %769 = vmatprep.subr.mxu0 0.0
        %770 = vmatpush1.msra.mxu0 0.0
        %771 = vmatprep.subr.mxu0 0.0
        %772 = vmatpush1.msra.mxu0 0.0
        %773 = vmatprep.subr.mxu0 0.0
        %774 = vmatpush1.msra.mxu0 0.0
        %775 = vmatprep.subr.mxu0 0.0
        %776 = vmatpush1.msra.mxu0 0.0
        %777 = vmatprep.subr.mxu0 0.0
        %778 = vmatpush1.msra.mxu0 0.0
        %779 = vmatprep.subr.mxu0 0.0
        %780 = vmatpush1.msra.mxu0 0.0
        %781 = vmatprep.subr.mxu0 0.0
        %782 = vmatpush1.msra.mxu0 0.0
        %783 = vmatprep.subr.mxu0 0.0
        %784 = vmatpush1.msra.mxu0 0.0
        %785 = vmatprep.subr.mxu0 0.0
        %786 = vmatpush1.msra.mxu0 0.0
        %787 = vmatprep.subr.mxu0 0.0
        %788 = vmatpush1.msra.mxu0 0.0
        %789 = vmatprep.subr.mxu0 0.0
        %790 = vmatpush1.msra.mxu0 0.0
        %791 = vmatprep.subr.mxu0 0.0
        %792 = vmatpush1.msra.mxu0 0.0
        %793 = vmatprep.subr.mxu0 0.0
        %794 = vmatpush1.msra.mxu0 0.0
        %795 = vmatprep.subr.mxu0 0.0
        %796 = vmatpush1.msra.mxu0 0.0
        %797 = vmatprep.subr.mxu0 0.0
        %798 = vmatpush1.msra.mxu0 0.0
        %799 = vmatprep.subr.mxu0 0.0
        %800 = vmatpush1.msra.mxu0 0.0
        %801 = vmatprep.subr.mxu0 0.0
        %802 = vmatpush1.msra.mxu0 0.0
        %803 = vmatprep.subr.mxu0 0.0
        %804 = vmatpush1.msra.mxu0 0.0
        %805 = vmatprep.subr.mxu0 0.0
        %806 = vmatpush1.msra.mxu0 0.0
        %807 = vmatprep.subr.mxu0 0.0
        %808 = vmatpush1.msra.mxu0 0.0
        %809 = vmatprep.subr.mxu0 0.0
        %810 = vmatpush1.msra.mxu0 0.0
        %811 = vmatprep.subr.mxu0 0.0
        %812 = vmatpush1.msra.mxu0 0.0
        %813 = vmatprep.subr.mxu0 0.0
        %814 = vmatpush1.msra.mxu0 0.0
        %815 = vmatprep.subr.mxu0 0.0
        %816 = vmatpush1.msra.mxu0 0.0
        %817 = vmatprep.mubr.f32.mxu0 0.0
        %818 = vmatmul.mubr.f32.gmra.mrb[0].mxu0 %v745
        %v819 = vpop.f32.mrb[0].mxu0
        %v820 = vadd.f32 0.0, %v819
        %v821 = vpop.f32.mrb[0].mxu0
        %822 = vmatprep.mubr.f32.mxu0 0.0
        %823 = vmatmul.mubr.f32.gmra.mrb[0].mxu0 %v747
        %v824 = vpop.f32.mrb[0].mxu0
        %v825 = vadd.f32 0.0, %v824
        %v826 = vpop.f32.mrb[0].mxu0
        %827 = vmatprep.mubr.f32.mxu0 0.0
        %828 = vmatmul.mubr.f32.gmra.mrb[0].mxu0 %v749
        %v829 = vpop.f32.mrb[0].mxu0
        %v830 = vadd.f32 0.0, %v829
        %v831 = vpop.f32.mrb[0].mxu0
        %832 = vmatprep.mubr.f32.mxu0 0.0
        %833 = vmatmul.mubr.f32.gmra.mrb[0].mxu0 %v751
        %v834 = vpop.f32.mrb[0].mxu0
        %v835 = vadd.f32 0.0, %v834
        %v836 = vpop.f32.mrb[0].mxu0
        %837 = vdwg.mxu0
        %v838 = vmul.f32 %v557, %v820
        %v839 = vmul.f32 %v558, %v825
        %v840 = vmul.f32 %v559, %v830
        %v841 = vmul.f32 %v560, %v835
        %842 = vst [vmem:[%s259 + $0x8] sm:$0xff] %v838
        %843 = vst [vmem:[%s259 + $0x18] sm:$0xff] %v839
        %844 = vst [vmem:[%s259 + $0x28] sm:$0xff] %v840
        %845 = vst [vmem:[%s259 + $0x38] sm:$0xff] %v841
        %s846 = sand.u32 %s136, 1
        %s847 = scalar_lea.sflag [#allocation4], %s846
        %s848 = sand.u32 %s136, 1
        %s849 = smul.addr %s848, 64
        %s850 = scalar_lea.vmem [#allocation3], %s849
        // Predicated region
        $region60: #{tpu_custom_call.1} parent=54 // pred_check
          %p851 = pneg %p146
        $region61: #{tpu_custom_call.1} parent=54 // pred_check_branch
          %853 = sbr.rel (%p851) target = $region63
        $region62: #{tpu_custom_call.1} parent=54 // pred_region
          %s854 = smul.u32 4, %s22
          %s855 = smul.u32 2, %s23
          %s857 = ssub.s32 1024, 1024
          %858 = vsyncadd %s847, %s857
          %s859 = smul.addr %s854, 4
          %s860 = sadd.s32 %s855, %s859
          %s861 = smul.addr %s860, 128
          %s862 = scalar_lea.hbm %s4, %s861
          %s863 = sshll.u32 %s850, 4
          %s864 = int_to_ptr.vmem [resolvable:$true] %s863
          %869 = dma.vmem_to_hbm [thread:$0]  %s864, 1024, %s862, %s847, 256, 512, 16
        $region63: #{tpu_custom_call.1} parent=54 // pred_fallthru
          _
      $region55: #{tpu_custom_call.1} parent=5 // pred_fallthru
        _
      %p870 = scmp.le.s32.totalorder 2, %s13
      // Predicated region
      $region64: #{tpu_custom_call.1} parent=5 // pred_check
        %p871 = pneg %p870
      $region65: #{tpu_custom_call.1} parent=5 // pred_check_branch
        %873 = sbr.rel (%p871) target = $region67
      $region66: #{tpu_custom_call.1} parent=5 // pred_region
        %s874 = ssub.s32 %s13, 2
        // Predicated region
        $region68: #{tpu_custom_call.1} parent=66 // pred_check
          %p875 = pneg %p152
        $region69: #{tpu_custom_call.1} parent=66 // pred_check_branch
          %877 = sbr.rel (%p875) target = $region71
        $region70: #{tpu_custom_call.1} parent=66 // pred_region
          %s878 = sand.u32 %s137, 1
          %s879 = scalar_lea.sflag [#allocation4], %s878
          %s880 = sand.u32 %s137, 1
          %s881 = smul.addr %s880, 64
          %s882 = scalar_lea.vmem [#allocation3], %s881
          %883 = dma.done %s879, 1024
        $region71: #{tpu_custom_call.1} parent=66 // pred_fallthru
          _
      $region67: #{tpu_custom_call.1} parent=5 // pred_fallthru
        _
    $region6: #{tpu_custom_call.1} parent=1 // loop_footer
      %s17 = sadd.s32 1, %s13
    $region7: #{tpu_custom_call.1} parent=1 // loop_footer_branch
      %12 = sbr.rel target = $region3
    $region8: #{tpu_custom_call.1} parent=1 // loop_exit
      _
    %884 = vsyncpa [#allocation4], 1
    %s885 = scalar_lea.sflag [#allocation4], 1
    %886 = vsyncpa %s885, 1

</llo_original>
